<compile_context>
chip_gen: v7x
topology: tpu7x:2x2x1
jax: 0.10.0
libtpu: 0.0.40
codegen_flags: <defaults>
</compile_context>

<pallas_src>
import functools

import jax
import jax.numpy as jnp
from jax.experimental import pallas as pl
from jax.experimental.pallas import tpu as pltpu


def _textcnn_kernel(filter_sizes, num_filters, seq_len, fused_gather, *refs):
    """Time-major flattened rows: row m = t*TB + b (t = time, b = batch-in-tile).

    fused_gather=True : refs = (ids (TB,L) i32, emb (V,E), w_all (E,Ntot),
                                bias (1,n*F), out (TB,n*F))
    fused_gather=False: refs = (x_t (L,TB,E), w_all, bias, out)
    """
    n = len(filter_sizes)
    F = num_filters
    L = seq_len
    max_k = max(filter_sizes)

    if fused_gather:
        ids_ref, emb_ref, w_all_ref, bias_ref, o_ref = refs
        cdtype = w_all_ref.dtype
        TB = ids_ref.shape[0]
        M = TB * L
        V = emb_ref.shape[0]
        # ---- fused embedding lookup: one-hot(ids) @ table on the MXU -------
        # ids_rep[t*TB + b, c] = ids[b, c]   (L stacked copies along sublanes)
        ids_rep = jnp.concatenate([ids_ref[...].astype(jnp.float32)] * L, axis=0)
        # t_of_row[t*TB + b] = t   (3-D iota + clean leading-dim collapse; no int div)
        t_of_row = jax.lax.broadcasted_iota(jnp.int32, (L, TB, 1), 0).reshape(M, 1)
        pos_iota = jax.lax.broadcasted_iota(jnp.int32, (M, L), 1)
        # pick lane c == t of each row -> token id of row m (exact in f32)
        ids_col = jnp.sum(jnp.where(pos_iota == t_of_row, ids_rep, 0.0),
                          axis=1, keepdims=True)                          # (M, 1)
        tok_iota = jax.lax.broadcasted_iota(jnp.int32, (M, V), 1).astype(jnp.float32)
        onehot = (ids_col == tok_iota).astype(cdtype)                     # (M, V)
        x2d = jnp.dot(onehot, emb_ref[...],
                      preferred_element_type=jnp.float32).astype(cdtype)  # (M, E)
    else:
        x_ref, w_all_ref, bias_ref, o_ref = refs
        TB = x_ref.shape[1]
        M = TB * L
        # (L, TB, E) -> (M, E): leading-dim collapse only (TB % 8 == 0) -> view.
        x2d = x_ref[...].reshape(M, x_ref.shape[-1])

    # ---- every tap of every filter size: ONE lane-dense MXU matmul ---------
    y = jnp.dot(x2d, w_all_ref[...], preferred_element_type=jnp.float32)  # (M, Ntot) f32

    # w_all is tap-major: the tap-j slab holds the filters with k > j.  Roll
    # only that narrow slab so row m picks up the value of time t + j of the
    # SAME batch element (shift is a multiple of 8 sublanes -> XLU rotate).
    slabs = []
    col = 0
    for j in range(max_k):
        grp = tuple(i for i in range(n) if filter_sizes[i] > j)
        width = len(grp) * F
        slab = y[:, col:col + width]
        if j == 0:
            slab = slab + bias_ref[...]          # conv bias folded into tap-0 slab
        else:
            slab = pltpu.roll(slab, M - j * TB, 0)   # == jnp.roll(slab, -j*TB, 0)
        slabs.append((grp, slab))
        col += width

    pooled = []
    for i, k in enumerate(filter_sizes):
        acc = slabs[0][1][:, i * F:(i + 1) * F]
        for j in range(1, k):
            grp, slab = slabs[j]
            pos = grp.index(i)
            acc = acc + slab[:, pos * F:(pos + 1) * F]
        conv = jnp.maximum(acc, 0.0).reshape(L, TB, F)
        # Static prefix max-pool over the valid conv positions t in [0, L-k]:
        # rows that wrapped around in the roll are simply never read.
        pooled.append(jnp.max(conv[:L - k + 1], axis=0))                  # (TB, F) f32

    o_ref[...] = jnp.concatenate(pooled, axis=1).astype(o_ref.dtype)      # (TB, n*F)


def _pick_batch_tile(B, L, filter_sizes, num_filters, E, vocab, fused,
                     compute_itemsize, vmem_budget_bytes=20 << 20):
    """Batch tile sized against the REAL VMEM consumers: the lane-padded f32
    matmul result, its narrow rolled tap slabs and the pooling working set,
    plus the one-hot gather when the embedding lookup is fused.  TB is a
    multiple of 8; when B > 8 it is capped at ~B/2 so the 'parallel' grid has
    >= 2 steps (keeps both v7x TensorCores busy)."""
    lanepad = lambda w: -(-w // 128) * 128
    n = len(filter_sizes)
    F = num_filters
    max_k = max(filter_sizes)
    Ntot = sum(filter_sizes) * F

    f32_lanes = lanepad(Ntot)                                            # y
    f32_lanes += sum(lanepad(F * sum(1 for k in filter_sizes if k > j))
                     for j in range(1, max_k))                           # rolled tap slabs
    f32_lanes += 2 * lanepad(n * F)                                      # conv / pool scratch
    per_row = 4 * L * f32_lanes
    per_row += compute_itemsize * L * lanepad(E)                         # x2d fed to the MXU
    if fused:
        per_row += compute_itemsize * L * lanepad(vocab)                 # one-hot matrix
        per_row += 4 * L * (2 * lanepad(L) + lanepad(1))                 # ids_rep / select / ids_col
        per_row += 2 * 4 * lanepad(L)                                    # double-buffered ids tile
    else:
        per_row += 2 * compute_itemsize * L * lanepad(E)                 # double-buffered x tile
    per_row += 2 * 4 * lanepad(n * F)                                    # double-buffered out tile

    tb = (vmem_budget_bytes // per_row) // 8 * 8
    tb = min(tb, 512)
    if B > 8:
        half = -(-B // 2)
        tb = min(tb, -(-half // 8) * 8)       # >= 2 grid steps when B > 8
    tb = min(tb, -(-B // 8) * 8)              # never exceed the padded batch
    return int(max(8, tb))


def textcnn_forward(input_ids, embeddings, conv_params, fc_w, fc_b,
                    filter_sizes, num_filters, outputs,
                    compute_dtype=jnp.bfloat16, batch_tile=None,
                    fuse_embedding_vocab_limit=2048):
    """conv_params: list of (w (k,E,F), b (1,F)) per filter size.
    fc_w: (num_filters*len(filter_sizes), outputs) (PyTorch weight transposed)."""
    filter_sizes = tuple(int(k) for k in filter_sizes)
    n = len(filter_sizes)
    F = int(num_filters)
    max_k = max(filter_sizes)
    vocab, E = embeddings.shape
    B, L = input_ids.shape
    assert L >= max_k, "sequence shorter than the largest filter size"
    assert fc_w.shape == (n * F, int(outputs))

    cdtype = jnp.dtype(compute_dtype)
    itemsize = cdtype.itemsize

    # Fused conv weight, tap-major: tap-j columns of every filter with k > j
    # are contiguous so the kernel only rolls the narrow slab it needs.
    cols = []
    for j in range(max_k):
        for (w, _), k in zip(conv_params, filter_sizes):
            if k > j:
                cols.append(w[j])                                     # (E, F)
    w_all = jnp.concatenate(cols, axis=1).astype(cdtype)              # (E, Ntot)
    Ntot = w_all.shape[1]
    bias_all = jnp.concatenate([b.reshape(1, F) for (_, b) in conv_params],
                               axis=1).astype(jnp.float32)            # (1, n*F)

    # Fuse the embedding gather only when the table is VMEM-resident friendly.
    fused = (vocab <= fuse_embedding_vocab_limit
             and vocab * E * itemsize <= (4 << 20))

    TB = batch_tile if batch_tile is not None else _pick_batch_tile(
        B, L, filter_sizes, F, E, vocab, fused, itemsize)
    TB = -(-int(TB) // 8) * 8
    B_pad = -(-B // TB) * TB
    grid = (B_pad // TB,)

    common_specs = [
        pl.BlockSpec((E, Ntot), lambda b: (0, 0)),        # fused conv weight: resident
        pl.BlockSpec((1, n * F), lambda b: (0, 0)),       # fused conv bias:   resident
    ]
    out_spec = pl.BlockSpec((TB, n * F), lambda b: (b, 0))
    out_shape = jax.ShapeDtypeStruct((B_pad, n * F), jnp.float32)

    kernel = functools.partial(_textcnn_kernel, filter_sizes, F, L, fused)
    cparams = pltpu.CompilerParams(dimension_semantics=("parallel",),
                                   vmem_limit_bytes=48 << 20)

    if fused:
        ids = input_ids.astype(jnp.int32)
        if B_pad != B:
            ids = jnp.pad(ids, ((0, B_pad - B), (0, 0)))
        emb_c = embeddings.astype(cdtype)
        in_specs = ([pl.BlockSpec((TB, L), lambda b: (b, 0)),         # ids tile: pipelined
                     pl.BlockSpec((vocab, E), lambda b: (0, 0))]      # emb table: resident
                    + common_specs)
        pooled = pl.pallas_call(
            kernel, grid=grid, in_specs=in_specs, out_specs=out_spec,
            out_shape=out_shape, compiler_params=cparams,
        )(ids, emb_c, w_all, bias_all)
    else:
        # TODO(synk): large-vocab path still materializes the gathered
        # activations in HBM; a manual per-row DMA gather from an HBM-resident
        # table would remove this round trip.
        x = jnp.take(embeddings, input_ids, axis=0).astype(cdtype)    # (B, L, E)
        if B_pad != B:
            x = jnp.pad(x, ((0, B_pad - B), (0, 0), (0, 0)))
        # Time-major (L, B, E): the kernel's flatten to (L*TB, E) is then a
        # pure leading-dim collapse (no in-kernel VMEM copy).
        x_t = jnp.transpose(x, (1, 0, 2))
        in_specs = ([pl.BlockSpec((L, TB, E), lambda b: (0, b, 0))] + common_specs)
        pooled = pl.pallas_call(
            kernel, grid=grid, in_specs=in_specs, out_specs=out_spec,
            out_shape=out_shape, compiler_params=cparams,
        )(x_t, w_all, bias_all)

    feat = pooled[:B]
    # Dropout is identity in eval mode.
    # TODO(synk): training-mode dropout (pltpu.prng_*) not implemented.
    return feat @ fc_w.astype(jnp.float32) + fc_b.astype(jnp.float32).reshape(1, -1)


def _reference_forward(input_ids, embeddings, conv_params, fc_w, fc_b,
                       filter_sizes, num_filters):
    x = jnp.take(embeddings, input_ids, axis=0).astype(jnp.float32)   # (B, L, E)
    _, L, _ = x.shape
    pooled = []
    for (w, b), k in zip(conv_params, filter_sizes):
        l_out = L - k + 1
        acc = jnp.zeros((x.shape[0], l_out, num_filters), jnp.float32)
        for j in range(k):
            acc = acc + jnp.einsum('ble,ef->blf', x[:, j:j + l_out, :], w[j])
        conv = jnp.maximum(acc + b[None, :, :], 0.0)
        pooled.append(conv.max(axis=1))
    feat = jnp.concatenate(pooled, axis=1)
    return feat @ fc_w + fc_b


if __name__ == "__main__":
    vocab_size = 50
    batch = 2
    seq_len = 8
    embeddings_size = 32
    num_filters = 16
    filter_sizes = [2, 3, 4]
    outputs = 4

    key = jax.random.PRNGKey(0)
    k_emb, k_ids, k_fc_w, k_fc_b, *k_conv = jax.random.split(key, 4 + 2 * len(filter_sizes))

    embeddings = jax.random.normal(k_emb, (vocab_size, embeddings_size), jnp.float32) * 0.1

    # Conv1d weights: PyTorch shape (F, E, k) -> kernel layout (k, E, F).
    conv_params = []
    for i, fs in enumerate(filter_sizes):
        w = jax.random.normal(k_conv[2 * i], (fs, embeddings_size, num_filters),
                              jnp.float32) * 0.05
        b = jax.random.normal(k_conv[2 * i + 1], (1, num_filters), jnp.float32) * 0.05
        conv_params.append((w, b))

    # Linear: PyTorch weight (outputs, F*n) -> stored transposed (F*n, outputs).
    fc_w = jax.random.normal(k_fc_w, (num_filters * len(filter_sizes), outputs),
                             jnp.float32) * 0.05
    fc_b = jax.random.normal(k_fc_b, (1, outputs), jnp.float32) * 0.05

    input_ids = jax.random.randint(k_ids, (batch, seq_len), 0, vocab_size, jnp.int32)

    ref = _reference_forward(input_ids, embeddings, conv_params, fc_w, fc_b,
                             filter_sizes, num_filters)

    # 1) f32 MXU path, fused in-kernel embedding gather (small vocab).
    out_f32 = jax.block_until_ready(
        textcnn_forward(input_ids, embeddings, conv_params, fc_w, fc_b,
                        filter_sizes, num_filters, outputs,
                        compute_dtype=jnp.float32))
    assert out_f32.shape == (batch, outputs)
    assert jnp.allclose(out_f32, ref, atol=2e-3, rtol=2e-3), "f32 kernel mismatch"

    # 2) bf16 MXU path (default; halves MXU-input bytes, f32 elementwise).
    out_bf16 = jax.block_until_ready(
        textcnn_forward(input_ids, embeddings, conv_params, fc_w, fc_b,
                        filter_sizes, num_filters, outputs,
                        compute_dtype=jnp.bfloat16))
    assert jnp.allclose(out_bf16, ref, atol=1e-2, rtol=1e-2), "bf16 kernel mismatch"

    # 3) Multi-step pipelined batch grid (>= 2 steps, "parallel" batch axis).
    batch_big = 32
    ids_big = jax.random.randint(jax.random.PRNGKey(1), (batch_big, seq_len),
                                 0, vocab_size, jnp.int32)
    ref_big = _reference_forward(ids_big, embeddings, conv_params, fc_w, fc_b,
                                 filter_sizes, num_filters)
    out_big = jax.block_until_ready(
        textcnn_forward(ids_big, embeddings, conv_params, fc_w, fc_b,
                        filter_sizes, num_filters, outputs,
                        compute_dtype=jnp.float32, batch_tile=8))
    assert out_big.shape == (batch_big, outputs)
    assert jnp.allclose(out_big, ref_big, atol=2e-3, rtol=2e-3), "gridded kernel mismatch"

    # 4) Large-vocab fallback path (embedding gather stays in XLA).
    vocab_big = 5000
    emb_big = jax.random.normal(jax.random.PRNGKey(2),
                                (vocab_big, embeddings_size), jnp.float32) * 0.1
    ids_v = jax.random.randint(jax.random.PRNGKey(3), (batch_big, seq_len),
                               0, vocab_big, jnp.int32)
    ref_v = _reference_forward(ids_v, emb_big, conv_params, fc_w, fc_b,
                               filter_sizes, num_filters)
    out_v = jax.block_until_ready(
        textcnn_forward(ids_v, emb_big, conv_params, fc_w, fc_b,
                        filter_sizes, num_filters, outputs,
                        compute_dtype=jnp.float32))
    assert jnp.allclose(out_v, ref_v, atol=2e-3, rtol=2e-3), "fallback path mismatch"

    print("KERNEL_OK")
</pallas_src>

<mosaic_0001>
module attributes {stable_mosaic.version = 11 : i64} {
  func.func @_textcnn_kernel(%arg0: i32, %arg1: memref<8x8xi32, #tpu.memory_space<vmem>>, %arg2: memref<50x32xf32, #tpu.memory_space<vmem>>, %arg3: memref<32x144xf32, #tpu.memory_space<vmem>>, %arg4: memref<1x48xf32, #tpu.memory_space<vmem>>, %arg5: memref<8x48xf32, #tpu.memory_space<vmem>>) attributes {dimension_semantics = [#tpu.dimension_semantics<parallel>], iteration_bounds = array<i64: 1>, scalar_prefetch = 0 : i64, scratch_operands = 0 : i64, tpu.core_type = #tpu.core_type<tc>, window_params = [{transform_indices = @transform_0, window_bounds = array<i64: 8, 8>}, {pipeline_mode = #tpu.pipeline_mode<synchronous>, transform_indices = @transform_1, window_bounds = array<i64: 50, 32>}, {pipeline_mode = #tpu.pipeline_mode<synchronous>, transform_indices = @transform_2, window_bounds = array<i64: 32, 144>}, {pipeline_mode = #tpu.pipeline_mode<synchronous>, transform_indices = @transform_3, window_bounds = array<i64: 1, 48>}, {transform_indices = @transform_4, window_bounds = array<i64: 8, 48>}]} {
    %c0 = arith.constant 0 : index
    %c0_0 = arith.constant 0 : index
    %0 = vector.load %arg1[%c0, %c0_0] : memref<8x8xi32, #tpu.memory_space<vmem>>, vector<8x8xi32>
    %1 = arith.sitofp %0 : vector<8x8xi32> to vector<8x8xf32>
    %2 = tpu.concatenate %1, %1, %1, %1, %1, %1, %1, %1 in 0 : vector<8x8xf32>, vector<8x8xf32>, vector<8x8xf32>, vector<8x8xf32>, vector<8x8xf32>, vector<8x8xf32>, vector<8x8xf32>, vector<8x8xf32> -> vector<64x8xf32>
    %3 = tpu.iota {dimensions = array<i32: 0>} : vector<8x8x1xi32>
    %4 = vector.shape_cast %3 : vector<8x8x1xi32> to vector<64x1xi32>
    %5 = tpu.iota {dimensions = array<i32: 1>} : vector<64x8xi32>
    %6 = vector.broadcast %4 : vector<64x1xi32> to vector<64x8xi32>
    %7 = arith.cmpi eq, %5, %6 : vector<64x8xi32>
    %cst = arith.constant 0.000000e+00 : f32
    %8 = vector.broadcast %cst : f32 to vector<64x8xf32>
    %9 = arith.select %7, %2, %8 : vector<64x8xi1>, vector<64x8xf32>
    %cst_1 = arith.constant dense<0.000000e+00> : vector<64xf32>
    %10 = vector.multi_reduction <add>, %9, %cst_1 [1] : vector<64x8xf32> to vector<64xf32>
    %11 = vector.shape_cast %10 : vector<64xf32> to vector<64x1xf32>
    %12 = tpu.iota {dimensions = array<i32: 1>} : vector<64x50xi32>
    %13 = arith.sitofp %12 : vector<64x50xi32> to vector<64x50xf32>
    %14 = vector.broadcast %11 : vector<64x1xf32> to vector<64x50xf32>
    %15 = arith.cmpf oeq, %14, %13 : vector<64x50xf32>
    %16 = arith.extui %15 : vector<64x50xi1> to vector<64x50xi32>
    %17 = arith.sitofp %16 : vector<64x50xi32> to vector<64x50xf32>
    %c0_2 = arith.constant 0 : index
    %c0_3 = arith.constant 0 : index
    %18 = vector.load %arg2[%c0_2, %c0_3] : memref<50x32xf32, #tpu.memory_space<vmem>>, vector<50x32xf32>
    %cst_4 = arith.constant dense<0.000000e+00> : vector<64x32xf32>
    %19 = tpu.matmul %17, %18, %cst_4 {dimension_numbers = #tpu.dot_dimension_numbers<[1], [0], [0], [1], [0, 0, 1, 1], [], []>} : vector<64x50xf32>, vector<50x32xf32>, vector<64x32xf32> -> vector<64x32xf32>
    %c0_5 = arith.constant 0 : index
    %c0_6 = arith.constant 0 : index
    %20 = vector.load %arg3[%c0_5, %c0_6] : memref<32x144xf32, #tpu.memory_space<vmem>>, vector<32x144xf32>
    %cst_7 = arith.constant dense<0.000000e+00> : vector<64x144xf32>
    %21 = tpu.matmul %19, %20, %cst_7 {dimension_numbers = #tpu.dot_dimension_numbers<[1], [0], [0], [1], [0, 0, 1, 1], [], []>} : vector<64x32xf32>, vector<32x144xf32>, vector<64x144xf32> -> vector<64x144xf32>
    %22 = vector.extract_strided_slice %21 {offsets = [0, 0], sizes = [64, 48], strides = [1, 1]} : vector<64x144xf32> to vector<64x48xf32>
    %c0_8 = arith.constant 0 : index
    %c0_9 = arith.constant 0 : index
    %23 = vector.load %arg4[%c0_8, %c0_9] : memref<1x48xf32, #tpu.memory_space<vmem>>, vector<1x48xf32>
    %24 = vector.broadcast %23 : vector<1x48xf32> to vector<64x48xf32>
    %25 = arith.addf %22, %24 : vector<64x48xf32>
    %26 = vector.extract_strided_slice %21 {offsets = [0, 48], sizes = [64, 48], strides = [1, 1]} : vector<64x144xf32> to vector<64x48xf32>
    %c56_i32 = arith.constant 56 : i32
    %27 = tpu.dynamic_rotate %26 by %c56_i32 dim 0 : vector<64x48xf32>, i32 -> vector<64x48xf32>
    %28 = vector.extract_strided_slice %21 {offsets = [0, 96], sizes = [64, 32], strides = [1, 1]} : vector<64x144xf32> to vector<64x32xf32>
    %c48_i32 = arith.constant 48 : i32
    %29 = tpu.dynamic_rotate %28 by %c48_i32 dim 0 : vector<64x32xf32>, i32 -> vector<64x32xf32>
    %30 = vector.extract_strided_slice %21 {offsets = [0, 128], sizes = [64, 16], strides = [1, 1]} : vector<64x144xf32> to vector<64x16xf32>
    %c40_i32 = arith.constant 40 : i32
    %31 = tpu.dynamic_rotate %30 by %c40_i32 dim 0 : vector<64x16xf32>, i32 -> vector<64x16xf32>
    %32 = vector.extract_strided_slice %25 {offsets = [0, 0], sizes = [64, 16], strides = [1, 1]} : vector<64x48xf32> to vector<64x16xf32>
    %33 = vector.extract_strided_slice %27 {offsets = [0, 0], sizes = [64, 16], strides = [1, 1]} : vector<64x48xf32> to vector<64x16xf32>
    %34 = arith.addf %32, %33 : vector<64x16xf32>
    %cst_10 = arith.constant 0.000000e+00 : f32
    %35 = vector.broadcast %cst_10 : f32 to vector<64x16xf32>
    %36 = arith.maximumf %34, %35 : vector<64x16xf32>
    %37 = vector.shape_cast %36 : vector<64x16xf32> to vector<8x8x16xf32>
    %38 = vector.extract_strided_slice %37 {offsets = [0, 0, 0], sizes = [7, 8, 16], strides = [1, 1, 1]} : vector<8x8x16xf32> to vector<7x8x16xf32>
    %cst_11 = arith.constant dense<0xFF800000> : vector<8x16xf32>
    %39 = vector.multi_reduction <maximumf>, %38, %cst_11 [0] : vector<7x8x16xf32> to vector<8x16xf32>
    %40 = vector.extract_strided_slice %25 {offsets = [0, 16], sizes = [64, 16], strides = [1, 1]} : vector<64x48xf32> to vector<64x16xf32>
    %41 = vector.extract_strided_slice %27 {offsets = [0, 16], sizes = [64, 16], strides = [1, 1]} : vector<64x48xf32> to vector<64x16xf32>
    %42 = arith.addf %40, %41 : vector<64x16xf32>
    %43 = vector.extract_strided_slice %29 {offsets = [0, 0], sizes = [64, 16], strides = [1, 1]} : vector<64x32xf32> to vector<64x16xf32>
    %44 = arith.addf %42, %43 : vector<64x16xf32>
    %cst_12 = arith.constant 0.000000e+00 : f32
    %45 = vector.broadcast %cst_12 : f32 to vector<64x16xf32>
    %46 = arith.maximumf %44, %45 : vector<64x16xf32>
    %47 = vector.shape_cast %46 : vector<64x16xf32> to vector<8x8x16xf32>
    %48 = vector.extract_strided_slice %47 {offsets = [0, 0, 0], sizes = [6, 8, 16], strides = [1, 1, 1]} : vector<8x8x16xf32> to vector<6x8x16xf32>
    %cst_13 = arith.constant dense<0xFF800000> : vector<8x16xf32>
    %49 = vector.multi_reduction <maximumf>, %48, %cst_13 [0] : vector<6x8x16xf32> to vector<8x16xf32>
    %50 = vector.extract_strided_slice %25 {offsets = [0, 32], sizes = [64, 16], strides = [1, 1]} : vector<64x48xf32> to vector<64x16xf32>
    %51 = vector.extract_strided_slice %27 {offsets = [0, 32], sizes = [64, 16], strides = [1, 1]} : vector<64x48xf32> to vector<64x16xf32>
    %52 = arith.addf %50, %51 : vector<64x16xf32>
    %53 = vector.extract_strided_slice %29 {offsets = [0, 16], sizes = [64, 16], strides = [1, 1]} : vector<64x32xf32> to vector<64x16xf32>
    %54 = arith.addf %52, %53 : vector<64x16xf32>
    %55 = arith.addf %54, %31 : vector<64x16xf32>
    %cst_14 = arith.constant 0.000000e+00 : f32
    %56 = vector.broadcast %cst_14 : f32 to vector<64x16xf32>
    %57 = arith.maximumf %55, %56 : vector<64x16xf32>
    %58 = vector.shape_cast %57 : vector<64x16xf32> to vector<8x8x16xf32>
    %59 = vector.extract_strided_slice %58 {offsets = [0, 0, 0], sizes = [5, 8, 16], strides = [1, 1, 1]} : vector<8x8x16xf32> to vector<5x8x16xf32>
    %cst_15 = arith.constant dense<0xFF800000> : vector<8x16xf32>
    %60 = vector.multi_reduction <maximumf>, %59, %cst_15 [0] : vector<5x8x16xf32> to vector<8x16xf32>
    %61 = tpu.concatenate %39, %49, %60 in 1 : vector<8x16xf32>, vector<8x16xf32>, vector<8x16xf32> -> vector<8x48xf32>
    %c0_16 = arith.constant 0 : index
    %c0_17 = arith.constant 0 : index
    %62 = vector.load %arg5[%c0_16, %c0_17] : memref<8x48xf32, #tpu.memory_space<vmem>>, vector<8x48xf32>
    tpu.vector_store %arg5[%c0_16, %c0_17], %61 {strides = array<i32>} : memref<8x48xf32, #tpu.memory_space<vmem>>, vector<8x48xf32>,
    return
  }
  func.func @transform_0(%arg0: i32) -> (i32, i32) {
    %c0_i32 = arith.constant 0 : i32
    %c0_i32_0 = arith.constant 0 : i32
    return %arg0, %c0_i32 : i32, i32
  }
  func.func @transform_1(%arg0: i32) -> (i32, i32) {
    %c0_i32 = arith.constant 0 : i32
    %c0_i32_0 = arith.constant 0 : i32
    %c0_i32_1 = arith.constant 0 : i32
    return %c0_i32, %c0_i32_0 : i32, i32
  }
  func.func @transform_2(%arg0: i32) -> (i32, i32) {
    %c0_i32 = arith.constant 0 : i32
    %c0_i32_0 = arith.constant 0 : i32
    %c0_i32_1 = arith.constant 0 : i32
    return %c0_i32, %c0_i32_0 : i32, i32
  }
  func.func @transform_3(%arg0: i32) -> (i32, i32) {
    %c0_i32 = arith.constant 0 : i32
    %c0_i32_0 = arith.constant 0 : i32
    %c0_i32_1 = arith.constant 0 : i32
    return %c0_i32, %c0_i32_0 : i32, i32
  }
  func.func @transform_4(%arg0: i32) -> (i32, i32) {
    %c0_i32 = arith.constant 0 : i32
    %c0_i32_0 = arith.constant 0 : i32
    return %arg0, %c0_i32 : i32, i32
  }
}

</mosaic_0001>

<llo_original>
// kernel: tpu_custom_call.1
$region0: #{tpu_custom_call.1}
  #allocation0 [shape = 'u32[]', space=smem, size = 0x4, offset = 0x4, fixed_abs, tag = 'smem constant byte address 0x4 - core index']
  #allocation1 [shape = 'u32[144,128]{1,0:T(1,128)}', space=vmem, size = 0x12000, scoped, tag = 'internal scratch']
  %s0 = inlined_call_operand.vmem [shape: s32[8,8], index: 0, kind: input, shape index: {}]
  %s1 = inlined_call_operand.vmem [shape: f32[50,32], index: 1, kind: input, shape index: {}]
  %s2 = inlined_call_operand.vmem [shape: f32[32,144], index: 2, kind: input, shape index: {}]
  %s3 = inlined_call_operand.vmem [shape: f32[1,48], index: 3, kind: input, shape index: {}]
  %s4 = inlined_call_operand.hbm [shape: f32[8,48], index: 4, kind: output, shape index: {}]
  %s5 = sld [smem:[#allocation0]]
  $region26: #{tpu_custom_call.1} parent=0
    _
  %s7 = ssub.s32 1, %s5
  %s8 = scalar_select 0, %s7, %s5
  $region1: #{tpu_custom_call.1} parent=0
    #allocation2 [shape = 'u8[4096]{0}', space=vmem, size = 0x1000, scoped, tag = 'output window, operand 0, single buffered']
    #allocation3 [shape = 's32[1]{0}', space=sflag, size = 0x4, scoped, tag = 'scoped memory for tpu_custom_call.1']
    %9 = vsyncpa [#allocation3], 0
    // Predicated region
    $region2: #{tpu_custom_call.1} parent=1 // pred_check
      _
    $region3: #{tpu_custom_call.1} parent=1 // pred_check_branch
      %11 = sbr.rel (0) target = $region5
    $region4: #{tpu_custom_call.1} parent=1 // pred_region
      _
    $region5: #{tpu_custom_call.1} parent=1 // pred_fallthru
      _
    // Predicated region
    $region6: #{tpu_custom_call.1} parent=1 // pred_check
      _
    $region7: #{tpu_custom_call.1} parent=1 // pred_check_branch
      %13 = sbr.rel (0) target = $region9
    $region8: #{tpu_custom_call.1} parent=1 // pred_region
      _
    $region9: #{tpu_custom_call.1} parent=1 // pred_fallthru
      _
    // Predicated region
    $region10: #{tpu_custom_call.1} parent=1 // pred_check
      _
    $region11: #{tpu_custom_call.1} parent=1 // pred_check_branch
      %15 = sbr.rel (0) target = $region13
    $region12: #{tpu_custom_call.1} parent=1 // pred_region
      _
    $region13: #{tpu_custom_call.1} parent=1 // pred_fallthru
      _
    // Predicated region
    $region14: #{tpu_custom_call.1} parent=1 // pred_check
      _
    $region15: #{tpu_custom_call.1} parent=1 // pred_check_branch
      %17 = sbr.rel (0) target = $region17
    $region16: #{tpu_custom_call.1} parent=1 // pred_region
      _
    $region17: #{tpu_custom_call.1} parent=1 // pred_fallthru
      _
    %v18 = vld [vmem:[%s0] sm:$0xff]
    %v19 = vcvt.s32.f32 %v18
    %v20 = vlaneseq
    %v21 = vand.u32 %v20, 127
    %vm22 = vcmp.eq.s32.totalorder %v21, 0
    %vm23 = vcmp.eq.s32.totalorder %v21, 1
    %vm24 = vcmp.eq.s32.totalorder %v21, 2
    %vm25 = vcmp.eq.s32.totalorder %v21, 3
    %vm26 = vcmp.eq.s32.totalorder %v21, 4
    %vm27 = vcmp.eq.s32.totalorder %v21, 5
    %vm28 = vcmp.eq.s32.totalorder %v21, 6
    %vm29 = vcmp.eq.s32.totalorder %v21, 7
    %v30 = vsel %vm22, %v19, 0.0
    %v31 = vsel %vm23, %v19, 0.0
    %v32 = vsel %vm24, %v19, 0.0
    %v33 = vsel %vm25, %v19, 0.0
    %v34 = vsel %vm26, %v19, 0.0
    %v35 = vsel %vm27, %v19, 0.0
    %v36 = vsel %vm28, %v19, 0.0
    %v37 = vsel %vm29, %v19, 0.0
    %vm38 = vcmask 64512
    %v39 = vsel %vm38, %v30, 0.0
    %40 = vadd.xlane.f32.xlu0 %v39
    %v41 = vpop.xlane.xlu0 %40
    %v42 = vsel %vm38, %v31, 0.0
    %43 = vadd.xlane.f32.xlu0 %v42
    %v44 = vpop.xlane.xlu0 %43
    %v45 = vsel %vm38, %v32, 0.0
    %46 = vadd.xlane.f32.xlu0 %v45
    %v47 = vpop.xlane.xlu0 %46
    %v48 = vsel %vm38, %v33, 0.0
    %49 = vadd.xlane.f32.xlu0 %v48
    %v50 = vpop.xlane.xlu0 %49
    %v51 = vsel %vm38, %v34, 0.0
    %52 = vadd.xlane.f32.xlu0 %v51
    %v53 = vpop.xlane.xlu0 %52
    %v54 = vsel %vm38, %v35, 0.0
    %55 = vadd.xlane.f32.xlu0 %v54
    %v56 = vpop.xlane.xlu0 %55
    %v57 = vsel %vm38, %v36, 0.0
    %58 = vadd.xlane.f32.xlu0 %v57
    %v59 = vpop.xlane.xlu0 %58
    %v60 = vsel %vm38, %v37, 0.0
    %61 = vadd.xlane.f32.xlu0 %v60
    %v62 = vpop.xlane.xlu0 %61
    %v63 = vcvt.s32.f32 %v21
    %vm64 = vcmp.eq.f32.partialorder %v41, %v63
    %vm65 = vcmp.eq.f32.partialorder %v44, %v63
    %vm66 = vcmp.eq.f32.partialorder %v47, %v63
    %vm67 = vcmp.eq.f32.partialorder %v50, %v63
    %vm68 = vcmp.eq.f32.partialorder %v53, %v63
    %vm69 = vcmp.eq.f32.partialorder %v56, %v63
    %vm70 = vcmp.eq.f32.partialorder %v59, %v63
    %vm71 = vcmp.eq.f32.partialorder %v62, %v63
    %v72 = vsel %vm64, 1, 0
    %v73 = vsel %vm65, 1, 0
    %v74 = vsel %vm66, 1, 0
    %v75 = vsel %vm67, 1, 0
    %v76 = vsel %vm68, 1, 0
    %v77 = vsel %vm69, 1, 0
    %v78 = vsel %vm70, 1, 0
    %v79 = vsel %vm71, 1, 0
    %v80 = vcvt.s32.f32 %v72
    %v81 = vcvt.s32.f32 %v73
    %v82 = vcvt.s32.f32 %v74
    %v83 = vcvt.s32.f32 %v75
    %v84 = vcvt.s32.f32 %v76
    %v85 = vcvt.s32.f32 %v77
    %v86 = vcvt.s32.f32 %v78
    %v87 = vcvt.s32.f32 %v79
    %v88 = vld [vmem:[%s1] sm:$0xff]
    %v89 = vld [vmem:[%s1 + $0x8] sm:$0xff]
    %v90 = vld [vmem:[%s1 + $0x10] sm:$0xff]
    %v91 = vld [vmem:[%s1 + $0x18] sm:$0xff]
    %v92 = vld [vmem:[%s1 + $0x20] sm:$0xff]
    %v93 = vld [vmem:[%s1 + $0x28] sm:$0xff]
    %v94 = vld [vmem:[%s1 + $0x30] sm:$0x3]
    %vm95 = vcmask 408576
    %v97 = vsel %vm95, %v80, 0
    %v100 = vsel %vm95, %v81, 0
    %v103 = vsel %vm95, %v82, 0
    %v106 = vsel %vm95, %v83, 0
    %v109 = vsel %vm95, %v84, 0
    %v112 = vsel %vm95, %v85, 0
    %v115 = vsel %vm95, %v86, 0
    %v118 = vsel %vm95, %v87, 0
    %vm120 = vcmask 1041408
    %v122 = vsel %vm120, %v94, 0
    %124 = vmatprep.subr.mxu0 0.0
    %125 = vmatpush1.msra.mxu0 %v88
    %126 = vmatprep.subr.mxu0 0.0
    %127 = vmatpush1.msra.mxu0 %v89
    %128 = vmatprep.subr.mxu0 0.0
    %129 = vmatpush1.msra.mxu0 %v90
    %130 = vmatprep.subr.mxu0 0.0
    %131 = vmatpush1.msra.mxu0 %v91
    %132 = vmatprep.subr.mxu0 0.0
    %133 = vmatpush1.msra.mxu0 %v92
    %134 = vmatprep.subr.mxu0 0.0
    %135 = vmatpush1.msra.mxu0 %v93
    %136 = vmatprep.subr.mxu0 0.0
    %137 = vmatpush1.msra.mxu0 %v122
    %138 = vmatprep.subr.mxu0 0.0
    %139 = vmatpush1.msra.mxu0 0.0
    %140 = vmatprep.subr.mxu0 0.0
    %141 = vmatpush1.msra.mxu0 0.0
    %142 = vmatprep.subr.mxu0 0.0
    %143 = vmatpush1.msra.mxu0 0.0
    %144 = vmatprep.subr.mxu0 0.0
    %145 = vmatpush1.msra.mxu0 0.0
    %146 = vmatprep.subr.mxu0 0.0
    %147 = vmatpush1.msra.mxu0 0.0
    %148 = vmatprep.subr.mxu0 0.0
    %149 = vmatpush1.msra.mxu0 0.0
    %150 = vmatprep.subr.mxu0 0.0
    %151 = vmatpush1.msra.mxu0 0.0
    %152 = vmatprep.subr.mxu0 0.0
    %153 = vmatpush1.msra.mxu0 0.0
    %154 = vmatprep.subr.mxu0 0.0
    %155 = vmatpush1.msra.mxu0 0.0
    %156 = vmatprep.subr.mxu0 0.0
    %157 = vmatpush1.msra.mxu0 0.0
    %158 = vmatprep.subr.mxu0 0.0
    %159 = vmatpush1.msra.mxu0 0.0
    %160 = vmatprep.subr.mxu0 0.0
    %161 = vmatpush1.msra.mxu0 0.0
    %162 = vmatprep.subr.mxu0 0.0
    %163 = vmatpush1.msra.mxu0 0.0
    %164 = vmatprep.subr.mxu0 0.0
    %165 = vmatpush1.msra.mxu0 0.0
    %166 = vmatprep.subr.mxu0 0.0
    %167 = vmatpush1.msra.mxu0 0.0
    %168 = vmatprep.subr.mxu0 0.0
    %169 = vmatpush1.msra.mxu0 0.0
    %170 = vmatprep.subr.mxu0 0.0
    %171 = vmatpush1.msra.mxu0 0.0
    %172 = vmatprep.subr.mxu0 0.0
    %173 = vmatpush1.msra.mxu0 0.0
    %174 = vmatprep.subr.mxu0 0.0
    %175 = vmatpush1.msra.mxu0 0.0
    %176 = vmatprep.subr.mxu0 0.0
    %177 = vmatpush1.msra.mxu0 0.0
    %178 = vmatprep.subr.mxu0 0.0
    %179 = vmatpush1.msra.mxu0 0.0
    %180 = vmatprep.subr.mxu0 0.0
    %181 = vmatpush1.msra.mxu0 0.0
    %182 = vmatprep.subr.mxu0 0.0
    %183 = vmatpush1.msra.mxu0 0.0
    %184 = vmatprep.subr.mxu0 0.0
    %185 = vmatpush1.msra.mxu0 0.0
    %186 = vmatprep.subr.mxu0 0.0
    %187 = vmatpush1.msra.mxu0 0.0
    %188 = vmatprep.mubr.f32.mxu0 0.0
    %189 = vmatmul.mubr.f32.gmra.mrb[0].mxu0 %v97
    %v190 = vpop.f32.mrb[0].mxu0
    %v191 = vadd.f32 0.0, %v190
    %v192 = vpop.f32.mrb[0].mxu0
    %193 = vmatprep.mubr.f32.mxu0 0.0
    %194 = vmatmul.mubr.f32.gmra.mrb[0].mxu0 %v100
    %v195 = vpop.f32.mrb[0].mxu0
    %v196 = vadd.f32 0.0, %v195
    %v197 = vpop.f32.mrb[0].mxu0
    %198 = vmatprep.mubr.f32.mxu0 0.0
    %199 = vmatmul.mubr.f32.gmra.mrb[0].mxu0 %v103
    %v200 = vpop.f32.mrb[0].mxu0
    %v201 = vadd.f32 0.0, %v200
    %v202 = vpop.f32.mrb[0].mxu0
    %203 = vmatprep.mubr.f32.mxu0 0.0
    %204 = vmatmul.mubr.f32.gmra.mrb[0].mxu0 %v106
    %v205 = vpop.f32.mrb[0].mxu0
    %v206 = vadd.f32 0.0, %v205
    %v207 = vpop.f32.mrb[0].mxu0
    %208 = vmatprep.mubr.f32.mxu0 0.0
    %209 = vmatmul.mubr.f32.gmra.mrb[0].mxu0 %v109
    %v210 = vpop.f32.mrb[0].mxu0
    %v211 = vadd.f32 0.0, %v210
    %v212 = vpop.f32.mrb[0].mxu0
    %213 = vmatprep.mubr.f32.mxu0 0.0
    %214 = vmatmul.mubr.f32.gmra.mrb[0].mxu0 %v112
    %v215 = vpop.f32.mrb[0].mxu0
    %v216 = vadd.f32 0.0, %v215
    %v217 = vpop.f32.mrb[0].mxu0
    %218 = vmatprep.mubr.f32.mxu0 0.0
    %219 = vmatmul.mubr.f32.gmra.mrb[0].mxu0 %v115
    %v220 = vpop.f32.mrb[0].mxu0
    %v221 = vadd.f32 0.0, %v220
    %v222 = vpop.f32.mrb[0].mxu0
    %223 = vmatprep.mubr.f32.mxu0 0.0
    %224 = vmatmul.mubr.f32.gmra.mrb[0].mxu0 %v118
    %v225 = vpop.f32.mrb[0].mxu0
    %v226 = vadd.f32 0.0, %v225
    %v227 = vpop.f32.mrb[0].mxu0
    %228 = vdwg.mxu0
    %v229 = vld [vmem:[%s2] sm:$0xff]
    %v230 = vld [vmem:[%s2 + $0x8] sm:$0xff]
    %v231 = vld [vmem:[%s2 + $0x10] sm:$0xff]
    %v232 = vld [vmem:[%s2 + $0x18] sm:$0xff]
    %v233 = vld [vmem:[%s2 + $0x20] sm:$0xff]
    %v234 = vld [vmem:[%s2 + $0x28] sm:$0xff]
    %v235 = vld [vmem:[%s2 + $0x30] sm:$0xff]
    %v236 = vld [vmem:[%s2 + $0x38] sm:$0xff]
    %vm237 = vcmask 261120
    %v239 = vsel %vm237, %v191, 0
    %v242 = vsel %vm237, %v196, 0
    %v245 = vsel %vm237, %v201, 0
    %v248 = vsel %vm237, %v206, 0
    %v251 = vsel %vm237, %v211, 0
    %v254 = vsel %vm237, %v216, 0
    %v257 = vsel %vm237, %v221, 0
    %v260 = vsel %vm237, %v226, 0
    %262 = vmatprep.subr.mxu0 %v230
    %263 = vmatpush1.msra.mxu0 %v229
    %264 = vmatprep.subr.mxu0 %v232
    %265 = vmatpush1.msra.mxu0 %v231
    %266 = vmatprep.subr.mxu0 %v234
    %267 = vmatpush1.msra.mxu0 %v233
    %268 = vmatprep.subr.mxu0 %v236
    %269 = vmatpush1.msra.mxu0 %v235
    %270 = vmatprep.subr.mxu0 0.0
    %271 = vmatpush1.msra.mxu0 0.0
    %272 = vmatprep.subr.mxu0 0.0
    %273 = vmatpush1.msra.mxu0 0.0
    %274 = vmatprep.subr.mxu0 0.0
    %275 = vmatpush1.msra.mxu0 0.0
    %276 = vmatprep.subr.mxu0 0.0
    %277 = vmatpush1.msra.mxu0 0.0
    %278 = vmatprep.subr.mxu0 0.0
    %279 = vmatpush1.msra.mxu0 0.0
    %280 = vmatprep.subr.mxu0 0.0
    %281 = vmatpush1.msra.mxu0 0.0
    %282 = vmatprep.subr.mxu0 0.0
    %283 = vmatpush1.msra.mxu0 0.0
    %284 = vmatprep.subr.mxu0 0.0
    %285 = vmatpush1.msra.mxu0 0.0
    %286 = vmatprep.subr.mxu0 0.0
    %287 = vmatpush1.msra.mxu0 0.0
    %288 = vmatprep.subr.mxu0 0.0
    %289 = vmatpush1.msra.mxu0 0.0
    %290 = vmatprep.subr.mxu0 0.0
    %291 = vmatpush1.msra.mxu0 0.0
    %292 = vmatprep.subr.mxu0 0.0
    %293 = vmatpush1.msra.mxu0 0.0
    %294 = vmatprep.subr.mxu0 0.0
    %295 = vmatpush1.msra.mxu0 0.0
    %296 = vmatprep.subr.mxu0 0.0
    %297 = vmatpush1.msra.mxu0 0.0
    %298 = vmatprep.subr.mxu0 0.0
    %299 = vmatpush1.msra.mxu0 0.0
    %300 = vmatprep.subr.mxu0 0.0
    %301 = vmatpush1.msra.mxu0 0.0
    %302 = vmatprep.subr.mxu0 0.0
    %303 = vmatpush1.msra.mxu0 0.0
    %304 = vmatprep.subr.mxu0 0.0
    %305 = vmatpush1.msra.mxu0 0.0
    %306 = vmatprep.subr.mxu0 0.0
    %307 = vmatpush1.msra.mxu0 0.0
    %308 = vmatprep.subr.mxu0 0.0
    %309 = vmatpush1.msra.mxu0 0.0
    %310 = vmatprep.subr.mxu0 0.0
    %311 = vmatpush1.msra.mxu0 0.0
    %312 = vmatprep.subr.mxu0 0.0
    %313 = vmatpush1.msra.mxu0 0.0
    %314 = vmatprep.subr.mxu0 0.0
    %315 = vmatpush1.msra.mxu0 0.0
    %316 = vmatprep.subr.mxu0 0.0
    %317 = vmatpush1.msra.mxu0 0.0
    %318 = vmatprep.subr.mxu0 0.0
    %319 = vmatpush1.msra.mxu0 0.0
    %320 = vmatprep.subr.mxu0 0.0
    %321 = vmatpush1.msra.mxu0 0.0
    %322 = vmatprep.subr.mxu0 0.0
    %323 = vmatpush1.msra.mxu0 0.0
    %324 = vmatprep.subr.mxu0 0.0
    %325 = vmatpush1.msra.mxu0 0.0
    %326 = vmatprep.mubr.f32.mxu0 0.0
    %327 = vmatmul.mubr.f32.gmra.mrb[0].mxu0 %v239
    %v328 = vpop.f32.mrb[0].mxu0
    %v329 = vadd.f32 0.0, %v328
    %v330 = vpop.f32.mrb[0].mxu0
    %331 = vmatprep.mubr.f32.mxu0 0.0
    %332 = vmatmul.mubr.f32.gmra.mrb[0].mxu0 %v242
    %v333 = vpop.f32.mrb[0].mxu0
    %v334 = vadd.f32 0.0, %v333
    %v335 = vpop.f32.mrb[0].mxu0
    %336 = vmatprep.mubr.f32.mxu0 0.0
    %337 = vmatmul.mubr.f32.gmra.mrb[0].mxu0 %v245
    %v338 = vpop.f32.mrb[0].mxu0
    %v339 = vadd.f32 0.0, %v338
    %v340 = vpop.f32.mrb[0].mxu0
    %341 = vmatprep.mubr.f32.mxu0 0.0
    %342 = vmatmul.mubr.f32.gmra.mrb[0].mxu0 %v248
    %v343 = vpop.f32.mrb[0].mxu0
    %v344 = vadd.f32 0.0, %v343
    %v345 = vpop.f32.mrb[0].mxu0
    %v346 = vadd.f32 0.0, %v345
    %347 = vmatprep.mubr.f32.mxu0 0.0
    %348 = vmatmul.mubr.f32.gmra.mrb[0].mxu0 %v251
    %v349 = vpop.f32.mrb[0].mxu0
    %v350 = vadd.f32 0.0, %v349
    %v351 = vpop.f32.mrb[0].mxu0
    %v352 = vadd.f32 0.0, %v351
    %353 = vmatprep.mubr.f32.mxu0 0.0
    %354 = vmatmul.mubr.f32.gmra.mrb[0].mxu0 %v254
    %v355 = vpop.f32.mrb[0].mxu0
    %v356 = vadd.f32 0.0, %v355
    %v357 = vpop.f32.mrb[0].mxu0
    %v358 = vadd.f32 0.0, %v357
    %359 = vmatprep.mubr.f32.mxu0 0.0
    %360 = vmatmul.mubr.f32.gmra.mrb[0].mxu0 %v257
    %v361 = vpop.f32.mrb[0].mxu0
    %v362 = vadd.f32 0.0, %v361
    %v363 = vpop.f32.mrb[0].mxu0
    %v364 = vadd.f32 0.0, %v363
    %365 = vmatprep.mubr.f32.mxu0 0.0
    %366 = vmatmul.mubr.f32.gmra.mrb[0].mxu0 %v260
    %v367 = vpop.f32.mrb[0].mxu0
    %v368 = vadd.f32 0.0, %v367
    %v369 = vpop.f32.mrb[0].mxu0
    %v370 = vadd.f32 0.0, %v369
    %371 = vdwg.mxu0
    %v372 = vld [vmem:[%s3] sm:$0x1]
    %v374 = vlaneseq
    %v375 = vshrl.u32 %v374, 7
    %v376 = vsub.s32 0, %v375
    %v377 = vrot.slane %v372, %v376
    %v379 = vadd.f32 %v329, %v377
    %v380 = vadd.f32 %v334, %v377
    %v381 = vadd.f32 %v339, %v377
    %v382 = vadd.f32 %v344, %v377
    %v383 = vadd.f32 %v350, %v377
    %v384 = vadd.f32 %v356, %v377
    %v385 = vadd.f32 %v362, %v377
    %393 = vrot.lane.b32.xlu0 %v334, 80
    %v394 = vpop.permute.xlu0 %393
    %395 = vrot.lane.b32.xlu0 %v339, 80
    %v396 = vpop.permute.xlu0 %395
    %397 = vrot.lane.b32.xlu0 %v344, 80
    %v398 = vpop.permute.xlu0 %397
    %399 = vrot.lane.b32.xlu0 %v350, 80
    %v400 = vpop.permute.xlu0 %399
    %401 = vrot.lane.b32.xlu0 %v356, 80
    %v402 = vpop.permute.xlu0 %401
    %403 = vrot.lane.b32.xlu0 %v362, 80
    %v404 = vpop.permute.xlu0 %403
    %405 = vrot.lane.b32.xlu0 %v368, 80
    %v406 = vpop.permute.xlu0 %405
    %414 = vrot.lane.b32.xlu0 %v339, 32
    %v415 = vpop.permute.xlu0 %414
    %416 = vrot.lane.b32.xlu0 %v344, 32
    %v417 = vpop.permute.xlu0 %416
    %418 = vrot.lane.b32.xlu0 %v350, 32
    %v419 = vpop.permute.xlu0 %418
    %420 = vrot.lane.b32.xlu0 %v356, 32
    %v421 = vpop.permute.xlu0 %420
    %422 = vrot.lane.b32.xlu0 %v362, 32
    %v423 = vpop.permute.xlu0 %422
    %424 = vrot.lane.b32.xlu0 %v368, 32
    %v425 = vpop.permute.xlu0 %424
    %v426 = vadd.f32 %v379, %v394
    %v427 = vadd.f32 %v380, %v396
    %v428 = vadd.f32 %v381, %v398
    %v429 = vadd.f32 %v382, %v400
    %v430 = vadd.f32 %v383, %v402
    %v431 = vadd.f32 %v384, %v404
    %v432 = vadd.f32 %v385, %v406
    %v433 = vmax.f32 %v426, 0.0
    %v434 = vmax.f32 %v427, 0.0
    %v435 = vmax.f32 %v428, 0.0
    %v436 = vmax.f32 %v429, 0.0
    %v437 = vmax.f32 %v430, 0.0
    %v438 = vmax.f32 %v431, 0.0
    %v439 = vmax.f32 %v432, 0.0
    %vm440 = vcmask 130048
    %v441 = vsel %vm440, %v433, -inf
    %v442 = vsel %vm440, %v434, -inf
    %v443 = vsel %vm440, %v435, -inf
    %v444 = vsel %vm440, %v436, -inf
    %v445 = vsel %vm440, %v437, -inf
    %v446 = vmax.f32 %v441, %v445
    %v447 = vsel %vm440, %v438, -inf
    %v448 = vmax.f32 %v442, %v447
    %v449 = vsel %vm440, %v439, -inf
    %v450 = vmax.f32 %v443, %v449
    %v451 = vmax.f32 %v446, %v448
    %v452 = vmax.f32 %v450, %v444
    %v453 = vmax.f32 %v451, %v452
    %454 = vrot.lane.b32.xlu0 %v415, 16
    %v455 = vpop.permute.xlu0 %454
    %456 = vrot.lane.b32.xlu0 %v417, 16
    %v457 = vpop.permute.xlu0 %456
    %458 = vrot.lane.b32.xlu0 %v419, 16
    %v459 = vpop.permute.xlu0 %458
    %460 = vrot.lane.b32.xlu0 %v421, 16
    %v461 = vpop.permute.xlu0 %460
    %462 = vrot.lane.b32.xlu0 %v423, 16
    %v463 = vpop.permute.xlu0 %462
    %464 = vrot.lane.b32.xlu0 %v425, 16
    %v465 = vpop.permute.xlu0 %464
    %v472 = vadd.f32 %v426, %v455
    %v473 = vadd.f32 %v427, %v457
    %v474 = vadd.f32 %v428, %v459
    %v475 = vadd.f32 %v429, %v461
    %v476 = vadd.f32 %v430, %v463
    %v477 = vadd.f32 %v431, %v465
    %v478 = vmax.f32 %v472, 0.0
    %v479 = vmax.f32 %v473, 0.0
    %v480 = vmax.f32 %v474, 0.0
    %v481 = vmax.f32 %v475, 0.0
    %v482 = vmax.f32 %v476, 0.0
    %v483 = vmax.f32 %v477, 0.0
    %vm484 = vcmask 261248
    %v485 = vsel %vm484, %v478, -inf
    %v486 = vsel %vm484, %v479, -inf
    %v487 = vsel %vm484, %v480, -inf
    %v488 = vsel %vm484, %v481, -inf
    %v489 = vsel %vm484, %v482, -inf
    %v490 = vmax.f32 %v485, %v489
    %v491 = vsel %vm484, %v483, -inf
    %v492 = vmax.f32 %v486, %v491
    %v493 = vmax.f32 %v490, %v492
    %v494 = vmax.f32 %v487, %v488
    %v495 = vmax.f32 %v493, %v494
    %501 = vrot.lane.b32.xlu0 %v346, 32
    %v502 = vpop.permute.xlu0 %501
    %503 = vrot.lane.b32.xlu0 %v352, 32
    %v504 = vpop.permute.xlu0 %503
    %505 = vrot.lane.b32.xlu0 %v358, 32
    %v506 = vpop.permute.xlu0 %505
    %507 = vrot.lane.b32.xlu0 %v364, 32
    %v508 = vpop.permute.xlu0 %507
    %509 = vrot.lane.b32.xlu0 %v370, 32
    %v510 = vpop.permute.xlu0 %509
    %v516 = vadd.f32 %v472, %v502
    %v517 = vadd.f32 %v473, %v504
    %v518 = vadd.f32 %v474, %v506
    %v519 = vadd.f32 %v475, %v508
    %v520 = vadd.f32 %v476, %v510
    %v521 = vmax.f32 %v516, 0.0
    %v522 = vmax.f32 %v517, 0.0
    %v523 = vmax.f32 %v518, 0.0
    %v524 = vmax.f32 %v519, 0.0
    %v525 = vmax.f32 %v520, 0.0
    %vm526 = vcmask 392448
    %v527 = vsel %vm526, %v521, -inf
    %v528 = vsel %vm526, %v522, -inf
    %v529 = vsel %vm526, %v523, -inf
    %v530 = vsel %vm526, %v524, -inf
    %v531 = vsel %vm526, %v525, -inf
    %v532 = vmax.f32 %v527, %v531
    %v533 = vmax.f32 %v532, %v528
    %v534 = vmax.f32 %v529, %v530
    %v535 = vmax.f32 %v533, %v534
    %v536 = vsel %vm440, %v453, %v495
    %v537 = vsel %vm237, %v536, %v535
    %vm538 = vcmask 392192
    %539 = vst.msk [vmem:[#allocation2] sm:$0xff] %vm538, %v537
    // Predicated region
    $region18: #{tpu_custom_call.1} parent=1 // pred_check
      _
    $region19: #{tpu_custom_call.1} parent=1 // pred_check_branch
      %541 = sbr.rel (0) target = $region21
    $region20: #{tpu_custom_call.1} parent=1 // pred_region
      %s543 = ssub.s32 128, 128
      %544 = vsyncadd [#allocation3], %s543
      %s546 = sshll.u32 [#allocation2], 4
      %s547 = int_to_ptr.vmem [resolvable:$true] %s546
      %549 = dma.vmem_to_hbm [thread:$0]  %s547, 128, %s4, [#allocation3]
    $region21: #{tpu_custom_call.1} parent=1 // pred_fallthru
      _
    // Predicated region
    $region22: #{tpu_custom_call.1} parent=1 // pred_check
      _
    $region23: #{tpu_custom_call.1} parent=1 // pred_check_branch
      %551 = sbr.rel (0) target = $region25
    $region24: #{tpu_custom_call.1} parent=1 // pred_region
      %552 = dma.done [#allocation3], 128
    $region25: #{tpu_custom_call.1} parent=1 // pred_fallthru
      _
    %553 = vsyncpa [#allocation3], 1

</llo_original>
